<compile_context>
chip_gen: v7x
topology: tpu7x:2x2x1
jax: 0.10.0
libtpu: 0.0.40
codegen_flags: <defaults>
</compile_context>

<pallas_src>
import functools

import jax
import jax.numpy as jnp
from jax.experimental import pallas as pl
from jax.experimental.pallas import tpu as pltpu


_NORM_EPS_SQ = 1e-16  # clamp on |x|^2; torch clamps the *product* of norms at
                      # 1e-16 -> differs only for (near) zero-norm rows.


def _contrastive_kernel(x_row_ref, x_col_ref, pos_ref, loss_ref,
                        m_sc, l_sc,
                        *, inv_tau, normalize, block_m, block_k):
    i = pl.program_id(0)
    k = pl.program_id(1)
    nk = pl.num_programs(1)

    @pl.when(k == 0)
    def _init():
        l_sc[...] = jnp.zeros(l_sc.shape, dtype=l_sc.dtype)
        if not normalize:
            m_sc[...] = jnp.full(m_sc.shape, -jnp.inf, dtype=m_sc.dtype)

    # (TM, TK) similarity tile; contract on D for both operands (no RHS
    # transpose).  Operands arrive pre-normalized / pre-cast from the wrapper.
    s = jax.lax.dot_general(
        x_row_ref[...], x_col_ref[...],
        dimension_numbers=(((1,), (1,)), ((), ())),
        preferred_element_type=jnp.float32)

    if normalize:
        # Cosine similarities are bounded by 1 -> fixed softmax max inv_tau:
        # no running max, no rescale of l, no cross-k serialization.
        p = jnp.exp((s - 1.0) * inv_tau)

        row0 = i * block_m
        col0 = k * block_k
        on_diag = jnp.logical_and(row0 < col0 + block_k, col0 < row0 + block_m)

        @pl.when(on_diag)
        def _():
            rows = row0 + jax.lax.broadcasted_iota(
                jnp.int32, (block_m, block_k), 0)
            cols = col0 + jax.lax.broadcasted_iota(
                jnp.int32, (block_m, block_k), 1)
            l_sc[...] += jnp.sum(jnp.where(rows == cols, 0.0, p),
                                 axis=-1, keepdims=True)

        @pl.when(jnp.logical_not(on_diag))
        def _():
            l_sc[...] += jnp.sum(p, axis=-1, keepdims=True)
    else:
        logits = s * inv_tau
        m_prev = m_sc[...]
        m_new = jnp.maximum(m_prev, jnp.max(logits, axis=-1, keepdims=True))
        l_sc[...] = (l_sc[...] * jnp.exp(m_prev - m_new)
                     + jnp.sum(jnp.exp(logits - m_new), axis=-1, keepdims=True))
        m_sc[...] = m_new

    @pl.when(k == nk - 1)
    def _fini():
        l = l_sc[...]
        if normalize:
            # diagonal already excluded; equals torch's log(sum - exp(1/tau))
            denom_log = inv_tau + jnp.log(l)
        else:
            # literal torch semantics: subtract exp(1/tau) from the full sum
            # (numerically fragile when the sum is close to exp(1/tau), but
            # that is exactly what the module computes).
            m = m_sc[...]
            denom_log = m + jnp.log(l - jnp.exp(inv_tau - m))
        # per-row  -log(pos / denom) = log(denom) - log(pos)
        loss_ref[...] = denom_log - pos_ref[...]


def _pick_tile(n, target):
    """Largest tile <= target dividing n; prefers multiples of 128, else 8."""
    n = int(n)
    target = max(int(target), 1)
    for step in (128, 8):
        t = min(target, n)
        t -= t % step
        while t >= step:
            if n % t == 0:
                return t
            t -= step
    return n


def _default_vmem_limit():
    # Explicit scoped-VMEM budget: 3/4 of what the chip actually has
    # (~96 MiB on 128 MiB v5e/v6e parts, ~48 MiB per TC on 64 MiB v7x).
    try:
        cap = int(pltpu.get_tpu_info().vmem_capacity_bytes)
        return cap * 3 // 4
    except Exception:
        return None


def _fit_tiles(n2, d, op_bytes, block_m, block_k, vmem_limit):
    """Pick (tm, tk) and shrink if the double-buffered footprint won't fit."""
    tm = _pick_tile(n2, block_m)
    tk = _pick_tile(n2, block_k)
    if vmem_limit is None:
        return tm, tk
    budget = vmem_limit * 3 // 4      # headroom for compiler-internal scratch

    def footprint(tm_, tk_):
        return (2 * (tm_ + tk_) * d * op_bytes   # double-buffered operand tiles
                + 2 * 4 * tm_ * tk_              # f32 logits tile + exp temp
                + 12 * tm_ * 4)                  # pos / out / l / m vectors

    while footprint(tm, tk) > budget:
        if tk > 8 and tk >= tm:
            new_tk = _pick_tile(n2, tk // 2)
            if new_tk < tk:
                tk = new_tk
                continue
        if tm > 8:
            new_tm = _pick_tile(n2, tm // 2)
            if new_tm < tm:
                tm = new_tm
                continue
        break
    return tm, tk


def contrastive_loss(xi, xj, *, tau=0.07, normalize=True,
                     block_m=1024, block_k=512, mxu_dtype=jnp.bfloat16):
    """NT-Xent contrastive loss.  xi, xj: (N, D).  Returns scalar float32.

    block_m/block_k: tile targets (clamped / VMEM-fit per shape and chip).
    mxu_dtype: matmul operand dtype.  bfloat16 (default) halves MXU cycles and
    column HBM bytes on all generations; softmax/normalization math stays f32.
    Use jnp.float32 for tight numerical agreement (recommended for
    normalize=False, whose logits are unbounded).
    """
    assert xi.shape == xj.shape and xi.ndim == 2
    n, d = xi.shape
    if n % 8 != 0:
        # TODO(synk): pad 2N up to a tile multiple and mask padded rows/cols
        # out of the logsumexp + mean for arbitrary batch sizes.
        raise NotImplementedError("batch size must be a multiple of 8")
    n2 = 2 * n
    inv_tau = float(1.0 / tau)

    # ---- one-time O(2N*D) preprocessing in the wrapper --------------------
    x = jnp.concatenate([xi, xj], axis=0).astype(jnp.float32)      # (2N, D)
    if normalize:
        sq = jnp.sum(x * x, axis=-1, keepdims=True)
        x_op = x * jax.lax.rsqrt(jnp.maximum(sq, _NORM_EPS_SQ))
        pos = jnp.sum(x_op[:n] * x_op[n:], axis=-1, keepdims=True) * inv_tau
    else:
        x_op = x
        pos = jnp.sum(xi.astype(jnp.float32) * xj.astype(jnp.float32),
                      axis=-1, keepdims=True) * inv_tau
    # pos stays f32 (exact numerator); denominator uses mxu_dtype operands.
    pos = jnp.concatenate([pos, pos], axis=0)                      # (2N, 1)
    x_op = x_op.astype(mxu_dtype)                                  # (2N, D)

    vmem_limit = _default_vmem_limit()
    tm, tk = _fit_tiles(n2, d, jnp.dtype(mxu_dtype).itemsize,
                        block_m, block_k, vmem_limit)
    r, c = n2 // tm, n2 // tk

    kernel = functools.partial(
        _contrastive_kernel,
        inv_tau=inv_tau,
        normalize=bool(normalize),
        block_m=tm, block_k=tk,
    )

    cp_kwargs = dict(dimension_semantics=("parallel", "arbitrary"))
    if vmem_limit is not None:
        cp_kwargs["vmem_limit_bytes"] = int(vmem_limit)

    per_row = pl.pallas_call(
        kernel,
        out_shape=jax.ShapeDtypeStruct((n2, 1), jnp.float32),
        grid_spec=pltpu.PrefetchScalarGridSpec(
            num_scalar_prefetch=0,
            grid=(r, c),
            in_specs=[
                pl.BlockSpec((tm, d), lambda i, k: (i, 0)),   # row tile (re-fetched only when i changes)
                pl.BlockSpec((tk, d), lambda i, k: (k, 0)),   # column (reduction) stream
                pl.BlockSpec((tm, 1), lambda i, k: (i, 0)),   # positive logit per row
            ],
            out_specs=pl.BlockSpec((tm, 1), lambda i, k: (i, 0)),
            scratch_shapes=[
                pltpu.VMEM((tm, 1), jnp.float32),   # running max (normalize=False only)
                pltpu.VMEM((tm, 1), jnp.float32),   # running sum
            ],
        ),
        compiler_params=pltpu.CompilerParams(**cp_kwargs),
    )(x_op, x_op, pos)

    return jnp.mean(per_row)


def _reference_contrastive(xi, xj, tau=0.07, normalize=True):
    """Pure-JAX literal translation of the PyTorch forward (f32, sanity check)."""
    hi = jax.lax.Precision.HIGHEST
    x = jnp.concatenate([xi, xj], axis=0).astype(jnp.float32)
    sim = jnp.matmul(x, x.T, precision=hi)
    if normalize:
        nrm = jnp.linalg.norm(x, axis=1, keepdims=True)
        sim = sim / jnp.maximum(nrm * nrm.T, 1e-16)
    sim = jnp.exp(sim / tau)
    if normalize:
        den = jnp.linalg.norm(xi, axis=1) * jnp.linalg.norm(xj, axis=1)
        sim_match = jnp.exp(jnp.sum(xi * xj, axis=-1) / den / tau)
    else:
        sim_match = jnp.exp(jnp.sum(xi * xj, axis=-1) / tau)
    sim_match = jnp.concatenate([sim_match, sim_match], axis=0)
    norm_sum = jnp.exp(jnp.ones(x.shape[0], jnp.float32) / tau)
    return jnp.mean(-jnp.log(sim_match / (jnp.sum(sim, axis=-1) - norm_sum)))


if __name__ == "__main__":
    key = jax.random.PRNGKey(0)
    kc, k1, k2, k3, k4, k5 = jax.random.split(key, 6)

    # Small deterministic inputs.  A shared component keeps pairwise cosine
    # similarities moderate (like real embeddings), so the loss is well
    # conditioned at the default tau=0.07.
    N, D = 8, 32
    common = 1.5 * jax.random.normal(kc, (1, D), dtype=jnp.float32)
    xi = common + jax.random.normal(k1, (N, D), dtype=jnp.float32)
    xj = common + jax.random.normal(k2, (N, D), dtype=jnp.float32)

    ref = _reference_contrastive(xi, xj, tau=0.07)

    # Default path: bf16 MXU operands, softmax math in f32.
    loss = contrastive_loss(xi, xj, tau=0.07)
    jax.block_until_ready(loss)
    assert bool(jnp.isfinite(loss)), loss
    assert jnp.allclose(loss, ref, rtol=1e-1, atol=1e-1), (loss, ref)

    # f32 MXU operands -> tight tolerance vs. the literal torch math.
    loss_f32 = contrastive_loss(xi, xj, tau=0.07, mxu_dtype=jnp.float32)
    assert jnp.allclose(loss_f32, ref, rtol=5e-3, atol=5e-3), (loss_f32, ref)

    # Larger shape exercising a multi-tile grid in both axes and both the
    # diagonal-tile and off-diagonal-tile code paths.
    N2, D2 = 64, 128
    common2 = 1.5 * jax.random.normal(k3, (1, D2), dtype=jnp.float32)
    xi2 = common2 + jax.random.normal(k4, (N2, D2), dtype=jnp.float32)
    xj2 = common2 + jax.random.normal(k5, (N2, D2), dtype=jnp.float32)
    ref2 = _reference_contrastive(xi2, xj2, tau=0.07)

    loss2_f32 = contrastive_loss(xi2, xj2, tau=0.07, block_m=32, block_k=32,
                                 mxu_dtype=jnp.float32)
    assert jnp.allclose(loss2_f32, ref2, rtol=5e-3, atol=5e-3), (loss2_f32, ref2)

    # Default tiles clamp to a single lane-aligned 128x128 tile here.
    loss2_bf16 = contrastive_loss(xi2, xj2, tau=0.07)
    assert jnp.allclose(loss2_bf16, ref2, rtol=1e-1, atol=1e-1), (loss2_bf16, ref2)

    # normalize=False path (module's literal "- exp(1/tau)" semantics); f32
    # operands since the logits are unbounded.
    xin, xjn = 0.2 * xi, 0.2 * xj
    loss_nf = contrastive_loss(xin, xjn, tau=0.07, normalize=False,
                               mxu_dtype=jnp.float32)
    ref_nf = _reference_contrastive(xin, xjn, tau=0.07, normalize=False)
    assert jnp.allclose(loss_nf, ref_nf, rtol=5e-3, atol=5e-3), (loss_nf, ref_nf)

    jax.block_until_ready((loss, loss_f32, loss2_f32, loss2_bf16, loss_nf))
    print("KERNEL_OK")
</pallas_src>

<mosaic_0001>
module attributes {stable_mosaic.version = 11 : i64} {
  func.func @_contrastive_kernel(%arg0: i32, %arg1: i32, %arg2: memref<16x32xbf16, #tpu.memory_space<vmem>>, %arg3: memref<16x32xbf16, #tpu.memory_space<vmem>>, %arg4: memref<16x1xf32, #tpu.memory_space<vmem>>, %arg5: memref<16x1xf32, #tpu.memory_space<vmem>>, %arg6: memref<16x1xf32, #tpu.memory_space<vmem>>, %arg7: memref<16x1xf32, #tpu.memory_space<vmem>>) attributes {dimension_semantics = [#tpu.dimension_semantics<parallel>, #tpu.dimension_semantics<arbitrary>], iteration_bounds = array<i64: 1, 1>, scalar_prefetch = 0 : i64, scratch_operands = 2 : i64, tpu.core_type = #tpu.core_type<tc>, window_params = [{transform_indices = @transform_0, window_bounds = array<i64: 16, 32>}, {transform_indices = @transform_1, window_bounds = array<i64: 16, 32>}, {transform_indices = @transform_2, window_bounds = array<i64: 16, 1>}, {transform_indices = @transform_3, window_bounds = array<i64: 16, 1>}]} {
    %c0_i32 = arith.constant 0 : i32
    %0 = arith.cmpi eq, %arg1, %c0_i32 : i32
    %1 = arith.extui %0 : i1 to i32
    %c0_i32_0 = arith.constant 0 : i32
    %2 = arith.cmpi ne, %1, %c0_i32_0 : i32
    scf.if %2 {
      %cst_13 = arith.constant 0.000000e+00 : f32
      %26 = vector.broadcast %cst_13 : f32 to vector<16x1xf32>
      %c0_14 = arith.constant 0 : index
      %c0_15 = arith.constant 0 : index
      %27 = vector.load %arg7[%c0_14, %c0_15] : memref<16x1xf32, #tpu.memory_space<vmem>>, vector<16x1xf32>
      tpu.vector_store %arg7[%c0_14, %c0_15], %26 {strides = array<i32>} : memref<16x1xf32, #tpu.memory_space<vmem>>, vector<16x1xf32>,
    } else {
    }
    %c0 = arith.constant 0 : index
    %c0_1 = arith.constant 0 : index
    %3 = vector.load %arg2[%c0, %c0_1] : memref<16x32xbf16, #tpu.memory_space<vmem>>, vector<16x32xbf16>
    %c0_2 = arith.constant 0 : index
    %c0_3 = arith.constant 0 : index
    %4 = vector.load %arg3[%c0_2, %c0_3] : memref<16x32xbf16, #tpu.memory_space<vmem>>, vector<16x32xbf16>
    %cst = arith.constant dense<0.000000e+00> : vector<16x16xf32>
    %5 = tpu.matmul %3, %4, %cst {dimension_numbers = #tpu.dot_dimension_numbers<[1], [1], [0], [0], [0, 0, 1, 0], [], []>} : vector<16x32xbf16>, vector<16x32xbf16>, vector<16x16xf32> -> vector<16x16xf32>
    %cst_4 = arith.constant 1.000000e+00 : f32
    %6 = vector.broadcast %cst_4 : f32 to vector<16x16xf32>
    %7 = arith.subf %5, %6 : vector<16x16xf32>
    %cst_5 = arith.constant 14.2857141 : f32
    %8 = vector.broadcast %cst_5 : f32 to vector<16x16xf32>
    %9 = arith.mulf %7, %8 : vector<16x16xf32>
    %10 = math.exp %9 : vector<16x16xf32>
    %c16_i32 = arith.constant 16 : i32
    %11 = arith.muli %arg0, %c16_i32 : i32
    %c16_i32_6 = arith.constant 16 : i32
    %12 = arith.muli %arg1, %c16_i32_6 : i32
    %c16_i32_7 = arith.constant 16 : i32
    %13 = arith.addi %12, %c16_i32_7 : i32
    %14 = arith.cmpi slt, %11, %13 : i32
    %c16_i32_8 = arith.constant 16 : i32
    %15 = arith.addi %11, %c16_i32_8 : i32
    %16 = arith.cmpi slt, %12, %15 : i32
    %17 = arith.andi %14, %16 : i1
    %18 = arith.extui %17 : i1 to i32
    %c0_i32_9 = arith.constant 0 : i32
    %19 = arith.cmpi ne, %18, %c0_i32_9 : i32
    scf.if %19 {
      %26 = tpu.iota {dimensions = array<i32: 0>} : vector<16x16xi32>
      %27 = vector.broadcast %11 : i32 to vector<16x16xi32>
      %28 = arith.addi %27, %26 : vector<16x16xi32>
      %29 = tpu.iota {dimensions = array<i32: 1>} : vector<16x16xi32>
      %30 = vector.broadcast %12 : i32 to vector<16x16xi32>
      %31 = arith.addi %30, %29 : vector<16x16xi32>
      %c0_13 = arith.constant 0 : index
      %c0_14 = arith.constant 0 : index
      %32 = vector.load %arg7[%c0_13, %c0_14] : memref<16x1xf32, #tpu.memory_space<vmem>>, vector<16x1xf32>
      %33 = arith.cmpi eq, %28, %31 : vector<16x16xi32>
      %cst_15 = arith.constant 0.000000e+00 : f32
      %34 = vector.broadcast %cst_15 : f32 to vector<16x16xf32>
      %35 = arith.select %33, %34, %10 : vector<16x16xi1>, vector<16x16xf32>
      %cst_16 = arith.constant dense<0.000000e+00> : vector<16xf32>
      %36 = vector.multi_reduction <add>, %35, %cst_16 [1] : vector<16x16xf32> to vector<16xf32>
      %37 = vector.shape_cast %36 : vector<16xf32> to vector<16x1xf32>
      %38 = arith.addf %32, %37 : vector<16x1xf32>
      %c0_17 = arith.constant 0 : index
      %c0_18 = arith.constant 0 : index
      %39 = vector.load %arg7[%c0_17, %c0_18] : memref<16x1xf32, #tpu.memory_space<vmem>>, vector<16x1xf32>
      tpu.vector_store %arg7[%c0_17, %c0_18], %38 {strides = array<i32>} : memref<16x1xf32, #tpu.memory_space<vmem>>, vector<16x1xf32>,
    } else {
    }
    %true = arith.constant true
    %20 = arith.xori %17, %true : i1
    %21 = arith.extui %20 : i1 to i32
    %c0_i32_10 = arith.constant 0 : i32
    %22 = arith.cmpi ne, %21, %c0_i32_10 : i32
    scf.if %22 {
      %c0_13 = arith.constant 0 : index
      %c0_14 = arith.constant 0 : index
      %26 = vector.load %arg7[%c0_13, %c0_14] : memref<16x1xf32, #tpu.memory_space<vmem>>, vector<16x1xf32>
      %cst_15 = arith.constant dense<0.000000e+00> : vector<16xf32>
      %27 = vector.multi_reduction <add>, %10, %cst_15 [1] : vector<16x16xf32> to vector<16xf32>
      %28 = vector.shape_cast %27 : vector<16xf32> to vector<16x1xf32>
      %29 = arith.addf %26, %28 : vector<16x1xf32>
      %c0_16 = arith.constant 0 : index
      %c0_17 = arith.constant 0 : index
      %30 = vector.load %arg7[%c0_16, %c0_17] : memref<16x1xf32, #tpu.memory_space<vmem>>, vector<16x1xf32>
      tpu.vector_store %arg7[%c0_16, %c0_17], %29 {strides = array<i32>} : memref<16x1xf32, #tpu.memory_space<vmem>>, vector<16x1xf32>,
    } else {
    }
    %c0_i32_11 = arith.constant 0 : i32
    %23 = arith.cmpi eq, %arg1, %c0_i32_11 : i32
    %24 = arith.extui %23 : i1 to i32
    %c0_i32_12 = arith.constant 0 : i32
    %25 = arith.cmpi ne, %24, %c0_i32_12 : i32
    scf.if %25 {
      %c0_13 = arith.constant 0 : index
      %c0_14 = arith.constant 0 : index
      %26 = vector.load %arg7[%c0_13, %c0_14] : memref<16x1xf32, #tpu.memory_space<vmem>>, vector<16x1xf32>
      %27 = math.log %26 : vector<16x1xf32>
      %cst_15 = arith.constant 14.2857141 : f32
      %28 = vector.broadcast %cst_15 : f32 to vector<16x1xf32>
      %29 = arith.addf %28, %27 : vector<16x1xf32>
      %c0_16 = arith.constant 0 : index
      %c0_17 = arith.constant 0 : index
      %30 = vector.load %arg4[%c0_16, %c0_17] : memref<16x1xf32, #tpu.memory_space<vmem>>, vector<16x1xf32>
      %31 = arith.subf %29, %30 : vector<16x1xf32>
      %c0_18 = arith.constant 0 : index
      %c0_19 = arith.constant 0 : index
      %32 = vector.load %arg5[%c0_18, %c0_19] : memref<16x1xf32, #tpu.memory_space<vmem>>, vector<16x1xf32>
      tpu.vector_store %arg5[%c0_18, %c0_19], %31 {strides = array<i32>} : memref<16x1xf32, #tpu.memory_space<vmem>>, vector<16x1xf32>,
    } else {
    }
    return
  }
  func.func @transform_0(%arg0: i32, %arg1: i32) -> (i32, i32) {
    %c0_i32 = arith.constant 0 : i32
    %c0_i32_0 = arith.constant 0 : i32
    return %arg0, %c0_i32 : i32, i32
  }
  func.func @transform_1(%arg0: i32, %arg1: i32) -> (i32, i32) {
    %c0_i32 = arith.constant 0 : i32
    %c0_i32_0 = arith.constant 0 : i32
    return %arg1, %c0_i32 : i32, i32
  }
  func.func @transform_2(%arg0: i32, %arg1: i32) -> (i32, i32) {
    %c0_i32 = arith.constant 0 : i32
    %c0_i32_0 = arith.constant 0 : i32
    return %arg0, %c0_i32 : i32, i32
  }
  func.func @transform_3(%arg0: i32, %arg1: i32) -> (i32, i32) {
    %c0_i32 = arith.constant 0 : i32
    %c0_i32_0 = arith.constant 0 : i32
    return %arg0, %c0_i32 : i32, i32
  }
}

</mosaic_0001>

<llo_original>
// kernel: tpu_custom_call.1
$region0: #{tpu_custom_call.1}
  #allocation0 [shape = 'u32[]', space=smem, size = 0x4, offset = 0x4, fixed_abs, tag = 'smem constant byte address 0x4 - core index']
  #allocation1 [shape = 'u32[144,128]{1,0:T(1,128)}', space=vmem, size = 0x12000, scoped, tag = 'internal scratch']
  #allocation2 [shape = 'f32[16,1]{1,0:T(8,128)}', space=vmem, size = 0x2000, scoped, tag = 'scratch operand']
  #allocation3 [shape = 'f32[16,1]{1,0:T(8,128)}', space=vmem, size = 0x2000, scoped, tag = 'scratch operand']
  %s0 = inlined_call_operand.vmem [shape: bf16[16,32], index: 0, kind: input, shape index: {}]
  %s1 = inlined_call_operand.vmem [shape: bf16[16,32], index: 1, kind: input, shape index: {}]
  %s2 = inlined_call_operand.vmem [shape: f32[16,1], index: 2, kind: input, shape index: {}]
  %s3 = inlined_call_operand.vmem [shape: f32[16,1], index: 3, kind: output, shape index: {}]
  %s4 = sld [smem:[#allocation0]]
  $region38: #{tpu_custom_call.1} parent=0
    _
  %s6 = ssub.s32 1, %s4
  %s7 = scalar_select 0, %s6, %s4
  // Predicated region
  $region2: #{tpu_custom_call.1} parent=0 // pred_check
    _
  $region3: #{tpu_custom_call.1} parent=0 // pred_check_branch
    %9 = sbr.rel (0) target = $region5
  $region4: #{tpu_custom_call.1} parent=0 // pred_region
    _
  $region5: #{tpu_custom_call.1} parent=0 // pred_fallthru
    _
  // Predicated region
  $region6: #{tpu_custom_call.1} parent=0 // pred_check
    _
  $region7: #{tpu_custom_call.1} parent=0 // pred_check_branch
    %11 = sbr.rel (0) target = $region9
  $region8: #{tpu_custom_call.1} parent=0 // pred_region
    _
  $region9: #{tpu_custom_call.1} parent=0 // pred_fallthru
    _
  // Predicated region
  $region10: #{tpu_custom_call.1} parent=0 // pred_check
    _
  $region11: #{tpu_custom_call.1} parent=0 // pred_check_branch
    %13 = sbr.rel (0) target = $region13
  $region12: #{tpu_custom_call.1} parent=0 // pred_region
    _
  $region13: #{tpu_custom_call.1} parent=0 // pred_fallthru
    _
  %p15 = scmp.eq.s32.totalorder 0, 0
  // Predicated region
  $region14: #{tpu_custom_call.1} parent=0 // pred_check
    %p16 = pneg %p15
  $region15: #{tpu_custom_call.1} parent=0 // pred_check_branch
    %18 = sbr.rel (%p16) target = $region17
  $region16: #{tpu_custom_call.1} parent=0 // pred_region
    %vm19 = vcmask 7168
    %20 = vst.msk [vmem:[#allocation3] sm:$0xff] %vm19, 0.0
    %21 = vst.msk [vmem:[#allocation3 + $0x8] sm:$0xff] %vm19, 0.0
  $region17: #{tpu_custom_call.1} parent=0 // pred_fallthru
    _
  %v22 = vld [vmem:[%s0] sm:$0xf]
  %v23 = vld [vmem:[%s0 + $0x4] sm:$0xf]
  %v24 = vld [vmem:[%s1] sm:$0xf]
  %v25 = vld [vmem:[%s1 + $0x4] sm:$0xf]
  %v28 = vunpack.c.l.b16 %v22
  %v29 = vunpack.c.l.b16 %v23
  %v30 = vpack.c.b16 %v29, %v28
  %v33 = vunpack.c.l.b16 %v24
  %v34 = vunpack.c.l.b16 %v25
  %v35 = vpack.c.b16 %v34, %v33
  %vm36 = vcmask 261120
  %v38 = vsel %vm36, %v30, 0
  %v41 = vsel %vm36, %v35, 0
  %43 = vmatprep.subr.bf16.mxu0 0
  %44 = vmatpush1.bf16.xpose.msra.mxu0 %v41
  %45 = vmatprep.subr.bf16.mxu0 0
  %46 = vmatpush1.bf16.xpose.msra.mxu0 0
  %47 = vmatprep.subr.bf16.mxu0 0
  %48 = vmatpush1.bf16.xpose.msra.mxu0 0
  %49 = vmatprep.subr.bf16.mxu0 0
  %50 = vmatpush1.bf16.xpose.msra.mxu0 0
  %51 = vmatprep.subr.bf16.mxu0 0
  %52 = vmatpush1.bf16.xpose.msra.mxu0 0
  %53 = vmatprep.subr.bf16.mxu0 0
  %54 = vmatpush1.bf16.xpose.msra.mxu0 0
  %55 = vmatprep.subr.bf16.mxu0 0
  %56 = vmatpush1.bf16.xpose.msra.mxu0 0
  %57 = vmatprep.subr.bf16.mxu0 0
  %58 = vmatpush1.bf16.xpose.msra.mxu0 0
  %59 = vmatprep.subr.bf16.mxu0 0
  %60 = vmatpush1.bf16.xpose.msra.mxu0 0
  %61 = vmatprep.subr.bf16.mxu0 0
  %62 = vmatpush1.bf16.xpose.msra.mxu0 0
  %63 = vmatprep.subr.bf16.mxu0 0
  %64 = vmatpush1.bf16.xpose.msra.mxu0 0
  %65 = vmatprep.subr.bf16.mxu0 0
  %66 = vmatpush1.bf16.xpose.msra.mxu0 0
  %67 = vmatprep.subr.bf16.mxu0 0
  %68 = vmatpush1.bf16.xpose.msra.mxu0 0
  %69 = vmatprep.subr.bf16.mxu0 0
  %70 = vmatpush1.bf16.xpose.msra.mxu0 0
  %71 = vmatprep.subr.bf16.mxu0 0
  %72 = vmatpush1.bf16.xpose.msra.mxu0 0
  %73 = vmatprep.subr.bf16.mxu0 0
  %74 = vmatpush1.bf16.xpose.msra.mxu0 0
  %75 = vmatprep.mubr.bf16.mxu0 0
  %76 = vmatmul.mubr.bf16.gmra.mrb[0].mxu0 %v38
  %v77 = vpop.f32.mrb[0].mxu0
  %v78 = vadd.f32 0.0, %v77
  %v79 = vpop.f32.mrb[0].mxu0
  %v80 = vpop.f32.mrb[0].mxu0
  %v81 = vadd.f32 0.0, %v80
  %v82 = vpop.f32.mrb[0].mxu0
  %83 = vdwg.mxu0
  %v84 = vsub.f32 %v78, 1.0
  %v85 = vsub.f32 %v81, 1.0
  %v86 = vmul.f32 %v84, 14.285714
  %v87 = vmul.f32 %v85, 14.285714
  %v88 = vmul.f32 %v86, 1.442695
  %v89 = vpow.pop %v88
  %v90 = vmul.f32 %v87, 1.442695
  %v91 = vpow.pop %v90
  %s92 = smul.u32 0, 16
  %s93 = smul.u32 0, 16
  %s94 = sadd.s32 %s93, 16
  %p95 = scmp.lt.s32.totalorder %s92, %s94
  %s96 = sadd.s32 %s92, 16
  %p97 = scmp.lt.s32.totalorder %s93, %s96
  %p98 = pnand %p95, %p97
  %p99 = pneg %p98
  // Predicated region
  $region18: #{tpu_custom_call.1} parent=0 // pred_check
    _
  $region19: #{tpu_custom_call.1} parent=0 // pred_check_branch
    %101 = sbr.rel (%p98) target = $region21
  $region20: #{tpu_custom_call.1} parent=0 // pred_region
    %v102 = vlaneseq
    %v103 = vshrl.u32 %v102, 7
    %v104 = vadd.s32 %v103, 8
    %v105 = vstv %s92
    %v106 = vadd.s32 %v105, %v103
    %v107 = vadd.s32 %v105, %v104
    %v108 = vlaneseq
    %v109 = vand.u32 %v108, 127
    %v110 = vstv %s93
    %v111 = vadd.s32 %v110, %v109
    %v112 = vld [vmem:[#allocation3] sm:$0xff]
    %v113 = vld [vmem:[#allocation3 + $0x8] sm:$0xff]
    %vm114 = vcmp.eq.s32.totalorder %v106, %v111
    %vm115 = vcmp.eq.s32.totalorder %v107, %v111
    %v116 = vsel %vm114, 0.0, %v89
    %v117 = vsel %vm115, 0.0, %v91
    %vm118 = vcmask 130048
    %v119 = vsel %vm118, %v116, 0.0
    %120 = vadd.xlane.f32.xlu0 %v119
    %v121 = vpop.xlane.xlu0 %120
    %v122 = vsel %vm118, %v117, 0.0
    %123 = vadd.xlane.f32.xlu0 %v122
    %v124 = vpop.xlane.xlu0 %123
    %v125 = vadd.f32 %v112, %v121
    %v126 = vadd.f32 %v113, %v124
    %vm127 = vcmask 7168
    %128 = vst.msk [vmem:[#allocation3] sm:$0xff] %vm127, %v125
    %129 = vst.msk [vmem:[#allocation3 + $0x8] sm:$0xff] %vm127, %v126
  $region21: #{tpu_custom_call.1} parent=0 // pred_fallthru
    _
  %p130 = pneg %p99
  // Predicated region
  $region22: #{tpu_custom_call.1} parent=0 // pred_check
    _
  $region23: #{tpu_custom_call.1} parent=0 // pred_check_branch
    %132 = sbr.rel (%p99) target = $region25
  $region24: #{tpu_custom_call.1} parent=0 // pred_region
    %v133 = vld [vmem:[#allocation3] sm:$0xff]
    %v134 = vld [vmem:[#allocation3 + $0x8] sm:$0xff]
    %vm135 = vcmask 130048
    %v136 = vsel %vm135, %v89, 0.0
    %137 = vadd.xlane.f32.xlu0 %v136
    %v138 = vpop.xlane.xlu0 %137
    %v139 = vsel %vm135, %v91, 0.0
    %140 = vadd.xlane.f32.xlu0 %v139
    %v141 = vpop.xlane.xlu0 %140
    %v142 = vadd.f32 %v133, %v138
    %v143 = vadd.f32 %v134, %v141
    %vm144 = vcmask 7168
    %145 = vst.msk [vmem:[#allocation3] sm:$0xff] %vm144, %v142
    %146 = vst.msk [vmem:[#allocation3 + $0x8] sm:$0xff] %vm144, %v143
  $region25: #{tpu_custom_call.1} parent=0 // pred_fallthru
    _
  // Predicated region
  $region26: #{tpu_custom_call.1} parent=0 // pred_check
    %p147 = pneg %p15
  $region27: #{tpu_custom_call.1} parent=0 // pred_check_branch
    %149 = sbr.rel (%p147) target = $region29
  $region28: #{tpu_custom_call.1} parent=0 // pred_region
    %v150 = vld [vmem:[#allocation3] sm:$0xff]
    %v151 = vld [vmem:[#allocation3 + $0x8] sm:$0xff]
    %v152 = vlog2.pop %v150
    %v153 = vmul.f32 %v152, 0.6931472
    %v154 = vlog2.pop %v151
    %v155 = vmul.f32 %v154, 0.6931472
    %v156 = vadd.f32 %v153, 14.285714
    %v157 = vadd.f32 %v155, 14.285714
    %v158 = vld [vmem:[%s2] sm:$0xff]
    %v159 = vld [vmem:[%s2 + $0x8] sm:$0xff]
    %v160 = vsub.f32 %v156, %v158
    %v161 = vsub.f32 %v157, %v159
    %vm162 = vcmask 7168
    %163 = vst.msk [vmem:[%s3] sm:$0xff] %vm162, %v160
    %164 = vst.msk [vmem:[%s3 + $0x8] sm:$0xff] %vm162, %v161
  $region29: #{tpu_custom_call.1} parent=0 // pred_fallthru
    _
  // Predicated region
  $region30: #{tpu_custom_call.1} parent=0 // pred_check
    _
  $region31: #{tpu_custom_call.1} parent=0 // pred_check_branch
    %166 = sbr.rel (0) target = $region33
  $region32: #{tpu_custom_call.1} parent=0 // pred_region
    _
  $region33: #{tpu_custom_call.1} parent=0 // pred_fallthru
    _
  // Predicated region
  $region34: #{tpu_custom_call.1} parent=0 // pred_check
    _
  $region35: #{tpu_custom_call.1} parent=0 // pred_check_branch
    %168 = sbr.rel (0) target = $region37
  $region36: #{tpu_custom_call.1} parent=0 // pred_region
    _
  $region37: #{tpu_custom_call.1} parent=0 // pred_fallthru
    _

</llo_original>
